<compile_context>
chip_gen: v6e
topology: v6e:2x2x1
jax: 0.10.0
libtpu: 0.0.40
codegen_flags: <defaults>
</compile_context>

<pallas_src>
import functools

import jax
import jax.numpy as jnp
from jax.experimental import pallas as pl
from jax.experimental.pallas import tpu as pltpu


# ---------------------------------------------------------------------------
# Kernel body (elementwise; computes in f32, casts on store)
# ---------------------------------------------------------------------------
def _lanczos_kernel(x_ref, o_ref, *, a):
    x = x_ref[...].astype(jnp.float32)

    af = jnp.float32(a)
    inv_a = jnp.float32(1.0 / a)
    pi = jnp.float32(3.14159265358979323846)
    one = jnp.float32(1.0)
    half = jnp.float32(0.5)
    two = jnp.float32(2.0)

    # Everything outside [-a, a] is masked to 0 at the end, so clamp first:
    # keeps the range reduction and the reciprocal in a small, safe range.
    xc = jnp.clip(x, -af, af)

    # sinc(x)*sinc(x/a) -> 1 as x -> 0; guard the reciprocal (covers x == 0
    # and denormals in one compare).
    tiny = jnp.abs(xc) < jnp.float32(1e-20)
    xs = jnp.where(tiny, one, xc)

    # --- shared reciprocal r ~= 1/(pi*x) on the EUP + one Newton step
    #     (approx rel. err ~2^-12 -> ~1e-7 after refinement).
    d = pi * xs
    r0 = pl.reciprocal(d, approx=True)
    r = r0 * (two - d * r0)

    # --- bounded-domain sin(pi*t):  t = k + f, k integer, |f| <= 0.5,
    #     sin(pi*t) = (-1)^k * sin(pi*f); sin(pi*f) via degree-9 odd Taylor
    #     polynomial in (pi*f) (max abs error ~3.6e-6 on |f| <= 0.5).
    def sin_pi_reduced(t):
        k = jnp.floor(t + half)
        f = t - k
        u = f * f
        p = jnp.float32(0.0821458866111282)            #  pi^9 / 9!
        p = p * u + jnp.float32(-0.5992645293207921)   # -pi^7 / 7!
        p = p * u + jnp.float32(2.5501640398773455)    #  pi^5 / 5!
        p = p * u + jnp.float32(-5.1677127800499700)   # -pi^3 / 3!
        p = p * u + pi                                 #  pi
        return p * f, k

    s1, k1 = sin_pi_reduced(xc)            # sin(pi*x)   up to (-1)^k1
    s2, k2 = sin_pi_reduced(xc * inv_a)    # sin(pi*x/a) up to (-1)^k2

    # Combined sign (-1)^(k1+k2) — all-float parity trick (no int round trip).
    ks = k1 + k2
    parity = ks - two * jnp.floor(ks * half)   # 0.0 or 1.0
    sign = one - two * parity                  # +1.0 or -1.0

    # sinc(x)*sinc(x/a) = sin(pi x) sin(pi x/a) * a / (pi x)^2
    #                   = sign * (P(f1)*r) * (a * P(f2) * r)
    # Grouping keeps intermediates O(1) even for very small |x|.
    y = sign * (s1 * r) * (af * (s2 * r))
    y = jnp.where(tiny, one, y)

    inside = (x >= -af) & (x < af)
    o_ref[...] = jnp.where(inside, y, jnp.float32(0.0)).astype(o_ref.dtype)


# ---------------------------------------------------------------------------
# Wrapper: lane-dense 2-D slab + generation-aware tiling
# ---------------------------------------------------------------------------
_W_CANDIDATES = (8192, 4096, 2048, 1024, 512, 256, 128)


def _pick_width(n):
    """Widest lane-dense (multiple-of-128) width dividing n, preferring >=8 rows."""
    best = None
    for cand in _W_CANDIDATES:
        if n % cand == 0:
            if best is None:
                best = cand
            if n // cand >= 8:
                return cand
    return best


@functools.lru_cache(maxsize=1)
def _tile_config():
    """(target_tile_bytes, vmem_limit_bytes) tuned per TPU generation."""
    try:
        kind = jax.devices()[0].device_kind.lower()
    except Exception:  # defensive: never let detection break the op
        kind = ""
    if "v5" in kind:
        # 2 MiB tiles -> 4 double-buffered copies = 8 MiB: fits the 16 MiB
        # scoped-VMEM default; larger tiles buy little at 0.82 TB/s.
        return 2 * 1024 * 1024, None
    if "v7" in kind:
        # 8 MiB tiles amortize the ~0.35us/step overhead at 3.2 TB/s; raise the
        # scoped limit (32 MiB default, 64 MiB physical per TC).
        return 8 * 1024 * 1024, 48 * 1024 * 1024
    # v6e and default: 4 MiB tiles = 16 MiB of buffers under a 32 MiB limit.
    return 4 * 1024 * 1024, 32 * 1024 * 1024


def _lanczos_2d(x2d, a):
    rows, W = x2d.shape
    dtype = x2d.dtype
    itemsize = jnp.dtype(dtype).itemsize
    sub = max(8, 32 // itemsize)              # sublane packing: f32=8, bf16=16, i8=32
    target_bytes, vmem_limit = _tile_config()

    if rows <= sub:
        block_rows = rows                     # full extent -> always layout-legal
    else:
        br = max(1, target_bytes // (W * itemsize))
        br = min(br, rows // 2)               # >= 2 grid steps (v7x megacore sharding)
        br = max(sub, (br // sub) * sub)      # sublane-aligned
        block_rows = min(br, rows)

    n = rows * W
    cost = pl.CostEstimate(
        flops=40 * n,           # 2 deg-9 odd polys + NR reciprocal + masking / element
        transcendentals=n,      # one EUP reciprocal per element
        bytes_accessed=2 * n * itemsize,
    )

    return pl.pallas_call(
        functools.partial(_lanczos_kernel, a=float(a)),
        out_shape=jax.ShapeDtypeStruct((rows, W), dtype),
        grid=(pl.cdiv(rows, block_rows),),
        in_specs=[pl.BlockSpec((block_rows, W), lambda i: (i, 0))],
        out_specs=pl.BlockSpec((block_rows, W), lambda i: (i, 0)),
        compiler_params=pltpu.CompilerParams(
            dimension_semantics=("parallel",),
            vmem_limit_bytes=vmem_limit,
        ),
        cost_estimate=cost,
    )(x2d)


def _lanczos_ref(x, a=6):
    """Pure-jnp mirror of LancozsKernelFunc.forward (also used for <128-elem tails)."""
    af = float(a)
    inside = (x >= -af) & (x < af)
    y = jnp.sinc(x) * jnp.sinc(x / af)
    return jnp.where(inside, y, jnp.zeros_like(y)).astype(x.dtype)


def lanczos_kernel_func(x, a=6):
    """Elementwise Lanczos kernel function; matches LancozsKernelFunc(a).forward(x)."""
    orig_shape = x.shape
    n = x.size
    if n == 0:
        return x
    x_flat = jnp.ravel(x)

    W = _pick_width(n)
    if W is not None:
        # Fast path (all multiple-of-128 sizes): no pad/slice copies at all.
        return _lanczos_2d(x_flat.reshape(n // W, W), a).reshape(orig_shape)

    n_main = (n // 128) * 128
    if n_main == 0:
        # Fewer than 128 elements: one padded (1, 128) row through the kernel.
        xp = jnp.pad(x_flat, (0, 128 - n))
        return _lanczos_2d(xp.reshape(1, 128), a).reshape(-1)[:n].reshape(orig_shape)

    # Ragged path: kernel on the multiple-of-128 main slab, plain jnp on the
    # (<128-element) tail — avoids full-array pad + [:n] slice HBM round trips.
    w_main = _pick_width(n_main)
    out_main = _lanczos_2d(x_flat[:n_main].reshape(n_main // w_main, w_main), a)
    out_tail = _lanczos_ref(x_flat[n_main:], a)
    return jnp.concatenate([out_main.reshape(-1), out_tail]).reshape(orig_shape)


if __name__ == "__main__":
    key = jax.random.PRNGKey(0)
    # NCHW input; values span inside and outside the [-a, a) support (a=6).
    x = jax.random.uniform(
        key, (2, 4, 16, 16), dtype=jnp.float32, minval=-8.0, maxval=8.0
    )
    out = jax.block_until_ready(lanczos_kernel_func(x, a=6))
    ref = _lanczos_ref(x, a=6)
    assert out.shape == x.shape
    assert out.dtype == x.dtype
    assert jnp.allclose(out, ref, atol=1e-4, rtol=1e-4), "mismatch vs reference (main)"

    # Ragged element count exercises the main-slab + jnp-tail path.
    x2 = jax.random.uniform(
        jax.random.PRNGKey(1), (7, 37), dtype=jnp.float32, minval=-8.0, maxval=8.0
    )
    out2 = jax.block_until_ready(lanczos_kernel_func(x2, a=6))
    assert jnp.allclose(
        out2, _lanczos_ref(x2, a=6), atol=1e-4, rtol=1e-4
    ), "mismatch vs reference (ragged)"

    print("KERNEL_OK")
</pallas_src>

<mosaic_0001>
module attributes {stable_mosaic.version = 11 : i64} {
  func.func @_lanczos_kernel(%arg0: i32, %arg1: memref<8x256xf32, #tpu.memory_space<vmem>>, %arg2: memref<8x256xf32, #tpu.memory_space<vmem>>) attributes {dimension_semantics = [#tpu.dimension_semantics<parallel>], iteration_bounds = array<i64: 1>, scalar_prefetch = 0 : i64, scratch_operands = 0 : i64, tpu.core_type = #tpu.core_type<tc>, window_params = [{transform_indices = @transform_0, window_bounds = array<i64: 8, 256>}, {transform_indices = @transform_1, window_bounds = array<i64: 8, 256>}]} {
    %c0 = arith.constant 0 : index
    %c0_0 = arith.constant 0 : index
    %0 = vector.load %arg1[%c0, %c0_0] : memref<8x256xf32, #tpu.memory_space<vmem>>, vector<8x256xf32>
    %cst = arith.constant 0.000000e+00 : f32
    %cst_1 = arith.constant 6.000000e+00 : f32
    %1 = arith.subf %cst, %cst_1 : f32
    %cst_2 = arith.constant 6.000000e+00 : f32
    %2 = vector.broadcast %1 : f32 to vector<8x256xf32>
    %3 = arith.maximumf %2, %0 : vector<8x256xf32>
    %4 = vector.broadcast %cst_2 : f32 to vector<8x256xf32>
    %5 = arith.minimumf %4, %3 : vector<8x256xf32>
    %6 = math.absf %5 : vector<8x256xf32>
    %cst_3 = arith.constant 9.99999968E-21 : f32
    %7 = vector.broadcast %cst_3 : f32 to vector<8x256xf32>
    %8 = arith.cmpf olt, %6, %7 : vector<8x256xf32>
    %cst_4 = arith.constant 1.000000e+00 : f32
    %9 = vector.broadcast %cst_4 : f32 to vector<8x256xf32>
    %10 = arith.select %8, %9, %5 : vector<8x256xi1>, vector<8x256xf32>
    %cst_5 = arith.constant 3.14159274 : f32
    %11 = vector.broadcast %cst_5 : f32 to vector<8x256xf32>
    %12 = arith.mulf %11, %10 : vector<8x256xf32>
    %13 = tpu.reciprocal %12 {approx = true} : vector<8x256xf32> -> vector<8x256xf32>
    %14 = arith.mulf %12, %13 : vector<8x256xf32>
    %cst_6 = arith.constant 2.000000e+00 : f32
    %15 = vector.broadcast %cst_6 : f32 to vector<8x256xf32>
    %16 = arith.subf %15, %14 : vector<8x256xf32>
    %17 = arith.mulf %13, %16 : vector<8x256xf32>
    %cst_7 = arith.constant 5.000000e-01 : f32
    %18 = vector.broadcast %cst_7 : f32 to vector<8x256xf32>
    %19 = arith.addf %5, %18 : vector<8x256xf32>
    %20 = math.floor %19 : vector<8x256xf32>
    %21 = arith.subf %5, %20 : vector<8x256xf32>
    %22 = arith.mulf %21, %21 : vector<8x256xf32>
    %cst_8 = arith.constant 0.0821458846 : f32
    %23 = vector.broadcast %cst_8 : f32 to vector<8x256xf32>
    %24 = arith.mulf %23, %22 : vector<8x256xf32>
    %cst_9 = arith.constant -0.599264503 : f32
    %25 = vector.broadcast %cst_9 : f32 to vector<8x256xf32>
    %26 = arith.addf %24, %25 : vector<8x256xf32>
    %27 = arith.mulf %26, %22 : vector<8x256xf32>
    %cst_10 = arith.constant 2.55016398 : f32
    %28 = vector.broadcast %cst_10 : f32 to vector<8x256xf32>
    %29 = arith.addf %27, %28 : vector<8x256xf32>
    %30 = arith.mulf %29, %22 : vector<8x256xf32>
    %cst_11 = arith.constant -5.16771269 : f32
    %31 = vector.broadcast %cst_11 : f32 to vector<8x256xf32>
    %32 = arith.addf %30, %31 : vector<8x256xf32>
    %33 = arith.mulf %32, %22 : vector<8x256xf32>
    %cst_12 = arith.constant 3.14159274 : f32
    %34 = vector.broadcast %cst_12 : f32 to vector<8x256xf32>
    %35 = arith.addf %33, %34 : vector<8x256xf32>
    %36 = arith.mulf %35, %21 : vector<8x256xf32>
    %cst_13 = arith.constant 0.166666672 : f32
    %37 = vector.broadcast %cst_13 : f32 to vector<8x256xf32>
    %38 = arith.mulf %5, %37 : vector<8x256xf32>
    %cst_14 = arith.constant 5.000000e-01 : f32
    %39 = vector.broadcast %cst_14 : f32 to vector<8x256xf32>
    %40 = arith.addf %38, %39 : vector<8x256xf32>
    %41 = math.floor %40 : vector<8x256xf32>
    %42 = arith.subf %38, %41 : vector<8x256xf32>
    %43 = arith.mulf %42, %42 : vector<8x256xf32>
    %cst_15 = arith.constant 0.0821458846 : f32
    %44 = vector.broadcast %cst_15 : f32 to vector<8x256xf32>
    %45 = arith.mulf %44, %43 : vector<8x256xf32>
    %cst_16 = arith.constant -0.599264503 : f32
    %46 = vector.broadcast %cst_16 : f32 to vector<8x256xf32>
    %47 = arith.addf %45, %46 : vector<8x256xf32>
    %48 = arith.mulf %47, %43 : vector<8x256xf32>
    %cst_17 = arith.constant 2.55016398 : f32
    %49 = vector.broadcast %cst_17 : f32 to vector<8x256xf32>
    %50 = arith.addf %48, %49 : vector<8x256xf32>
    %51 = arith.mulf %50, %43 : vector<8x256xf32>
    %cst_18 = arith.constant -5.16771269 : f32
    %52 = vector.broadcast %cst_18 : f32 to vector<8x256xf32>
    %53 = arith.addf %51, %52 : vector<8x256xf32>
    %54 = arith.mulf %53, %43 : vector<8x256xf32>
    %cst_19 = arith.constant 3.14159274 : f32
    %55 = vector.broadcast %cst_19 : f32 to vector<8x256xf32>
    %56 = arith.addf %54, %55 : vector<8x256xf32>
    %57 = arith.mulf %56, %42 : vector<8x256xf32>
    %58 = arith.addf %20, %41 : vector<8x256xf32>
    %cst_20 = arith.constant 5.000000e-01 : f32
    %59 = vector.broadcast %cst_20 : f32 to vector<8x256xf32>
    %60 = arith.mulf %58, %59 : vector<8x256xf32>
    %61 = math.floor %60 : vector<8x256xf32>
    %cst_21 = arith.constant 2.000000e+00 : f32
    %62 = vector.broadcast %cst_21 : f32 to vector<8x256xf32>
    %63 = arith.mulf %62, %61 : vector<8x256xf32>
    %64 = arith.subf %58, %63 : vector<8x256xf32>
    %cst_22 = arith.constant 2.000000e+00 : f32
    %65 = vector.broadcast %cst_22 : f32 to vector<8x256xf32>
    %66 = arith.mulf %65, %64 : vector<8x256xf32>
    %cst_23 = arith.constant 1.000000e+00 : f32
    %67 = vector.broadcast %cst_23 : f32 to vector<8x256xf32>
    %68 = arith.subf %67, %66 : vector<8x256xf32>
    %69 = arith.mulf %36, %17 : vector<8x256xf32>
    %70 = arith.mulf %68, %69 : vector<8x256xf32>
    %71 = arith.mulf %57, %17 : vector<8x256xf32>
    %cst_24 = arith.constant 6.000000e+00 : f32
    %72 = vector.broadcast %cst_24 : f32 to vector<8x256xf32>
    %73 = arith.mulf %72, %71 : vector<8x256xf32>
    %74 = arith.mulf %70, %73 : vector<8x256xf32>
    %cst_25 = arith.constant 1.000000e+00 : f32
    %75 = vector.broadcast %cst_25 : f32 to vector<8x256xf32>
    %76 = arith.select %8, %75, %74 : vector<8x256xi1>, vector<8x256xf32>
    %cst_26 = arith.constant 0.000000e+00 : f32
    %cst_27 = arith.constant 6.000000e+00 : f32
    %77 = arith.subf %cst_26, %cst_27 : f32
    %78 = vector.broadcast %77 : f32 to vector<8x256xf32>
    %79 = arith.cmpf oge, %0, %78 : vector<8x256xf32>
    %cst_28 = arith.constant 6.000000e+00 : f32
    %80 = vector.broadcast %cst_28 : f32 to vector<8x256xf32>
    %81 = arith.cmpf olt, %0, %80 : vector<8x256xf32>
    %82 = arith.andi %79, %81 : vector<8x256xi1>
    %cst_29 = arith.constant 0.000000e+00 : f32
    %83 = vector.broadcast %cst_29 : f32 to vector<8x256xf32>
    %84 = arith.select %82, %76, %83 : vector<8x256xi1>, vector<8x256xf32>
    %c0_30 = arith.constant 0 : index
    %c0_31 = arith.constant 0 : index
    %85 = vector.load %arg2[%c0_30, %c0_31] : memref<8x256xf32, #tpu.memory_space<vmem>>, vector<8x256xf32>
    tpu.vector_store %arg2[%c0_30, %c0_31], %84 {strides = array<i32>} : memref<8x256xf32, #tpu.memory_space<vmem>>, vector<8x256xf32>,
    return
  }
  func.func @transform_0(%arg0: i32) -> (i32, i32) {
    %c0_i32 = arith.constant 0 : i32
    %c0_i32_0 = arith.constant 0 : i32
    return %arg0, %c0_i32 : i32, i32
  }
  func.func @transform_1(%arg0: i32) -> (i32, i32) {
    %c0_i32 = arith.constant 0 : i32
    %c0_i32_0 = arith.constant 0 : i32
    return %arg0, %c0_i32 : i32, i32
  }
}

</mosaic_0001>

<llo_original>
// kernel: tpu_custom_call.1
$region0: #{tpu_custom_call.1}
  #allocation0 [shape = 'u32[]', space=smem, size = 0x4, offset = 0x4, fixed_abs, tag = 'smem constant byte address 0x4 - core index']
  #allocation1 [shape = 'u32[144,128]{1,0:T(1,128)}', space=vmem, size = 0x12000, scoped, tag = 'internal scratch']
  %s0 = inlined_call_operand.hbm [shape: f32[8,256], index: 0, kind: input, shape index: {}]
  %s1 = inlined_call_operand.hbm [shape: f32[8,256], index: 1, kind: output, shape index: {}]
  %s2 = sld [smem:[#allocation0]]
  $region18: #{tpu_custom_call.1} parent=0
    _
  %s4 = ssub.s32 1, %s2
  %s5 = scalar_select 0, %s4, %s2
  $region1: #{tpu_custom_call.1} parent=0
    #allocation2 [shape = 'u8[8192]{0}', space=vmem, size = 0x2000, scoped, tag = 'input window, operand 0, single buffered']
    #allocation3 [shape = 's32[1]{0}', space=sflag, size = 0x4, scoped, tag = 'scoped memory for tpu_custom_call.1']
    #allocation4 [shape = 's32[1]{0}', space=sflag, size = 0x4, scoped, tag = 'scoped memory for tpu_custom_call.1']
    #allocation5 [shape = 'u8[8192]{0}', space=vmem, size = 0x2000, scoped, tag = 'output window, operand 0, single buffered']
    %6 = vsyncpa [#allocation3], 0
    %7 = vsyncpa [#allocation4], 0
    // Predicated region
    $region2: #{tpu_custom_call.1} parent=1 // pred_check
      _
    $region3: #{tpu_custom_call.1} parent=1 // pred_check_branch
      %9 = sbr.rel (0) target = $region5
    $region4: #{tpu_custom_call.1} parent=1 // pred_region
      %s11 = ssub.s32 256, 256
      %12 = vsyncadd [#allocation3], %s11
      %s14 = sshll.u32 [#allocation2], 4
      %s15 = int_to_ptr.vmem [resolvable:$true] %s14
      %17 = dma.hbm_to_vmem [thread:$0]  %s0, 256, %s15, [#allocation3]
    $region5: #{tpu_custom_call.1} parent=1 // pred_fallthru
      _
    // Predicated region
    $region6: #{tpu_custom_call.1} parent=1 // pred_check
      _
    $region7: #{tpu_custom_call.1} parent=1 // pred_check_branch
      %19 = sbr.rel (0) target = $region9
    $region8: #{tpu_custom_call.1} parent=1 // pred_region
      %20 = dma.done [#allocation3], 256
    $region9: #{tpu_custom_call.1} parent=1 // pred_fallthru
      _
    %v21 = vld [vmem:[#allocation2] sm:$0xff]
    %v22 = vld [vmem:[#allocation2 + $0x8] sm:$0xff]
    %v23 = vmax.f32 %v21, -6.0
    %v24 = vmax.f32 %v22, -6.0
    %v25 = vmin.f32 %v23, 6.0
    %v26 = vmin.f32 %v24, 6.0
    %v27 = vand.u32 2147483647, %v25
    %v28 = vand.u32 2147483647, %v26
    %vm29 = vcmp.lt.f32.partialorder %v27, 1e-20
    %vm30 = vcmp.lt.f32.partialorder %v28, 1e-20
    %v31 = vsel %vm29, 1.0, %v25
    %v32 = vsel %vm30, 1.0, %v26
    %v33 = vmul.f32 %v31, 3.1415927
    %v34 = vmul.f32 %v32, 3.1415927
    %v35 = vrcp.pop %v33
    %v36 = vrcp.pop %v34
    %v37 = vmul.f32 %v33, %v35
    %v38 = vmul.f32 %v34, %v36
    %v39 = vsub.f32 2.0, %v37
    %v40 = vsub.f32 2.0, %v38
    %v41 = vmul.f32 %v35, %v39
    %v42 = vmul.f32 %v36, %v40
    %v43 = vadd.f32 %v25, 0.5
    %v44 = vadd.f32 %v26, 0.5
    %v45 = vfloor.f32 %v43
    %v46 = vfloor.f32 %v44
    %v47 = vsub.f32 %v25, %v45
    %v48 = vsub.f32 %v26, %v46
    %v49 = vmul.f32 %v47, %v47
    %v50 = vmul.f32 %v48, %v48
    %v51 = vmul.f32 %v49, 0.082145885
    %v52 = vmul.f32 %v50, 0.082145885
    %v53 = vadd.f32 %v51, -0.5992645
    %v54 = vadd.f32 %v52, -0.5992645
    %v55 = vmul.f32 %v53, %v49
    %v56 = vmul.f32 %v54, %v50
    %v57 = vadd.f32 %v55, 2.550164
    %v58 = vadd.f32 %v56, 2.550164
    %v59 = vmul.f32 %v57, %v49
    %v60 = vmul.f32 %v58, %v50
    %v61 = vadd.f32 %v59, -5.1677127
    %v62 = vadd.f32 %v60, -5.1677127
    %v63 = vmul.f32 %v61, %v49
    %v64 = vmul.f32 %v62, %v50
    %v65 = vadd.f32 %v63, 3.1415927
    %v66 = vadd.f32 %v64, 3.1415927
    %v67 = vmul.f32 %v65, %v47
    %v68 = vmul.f32 %v66, %v48
    %v69 = vmul.f32 %v25, 0.16666667
    %v70 = vmul.f32 %v26, 0.16666667
    %v71 = vadd.f32 %v69, 0.5
    %v72 = vadd.f32 %v70, 0.5
    %v73 = vfloor.f32 %v71
    %v74 = vfloor.f32 %v72
    %v75 = vsub.f32 %v69, %v73
    %v76 = vsub.f32 %v70, %v74
    %v77 = vmul.f32 %v75, %v75
    %v78 = vmul.f32 %v76, %v76
    %v79 = vmul.f32 %v77, 0.082145885
    %v80 = vmul.f32 %v78, 0.082145885
    %v81 = vadd.f32 %v79, -0.5992645
    %v82 = vadd.f32 %v80, -0.5992645
    %v83 = vmul.f32 %v81, %v77
    %v84 = vmul.f32 %v82, %v78
    %v85 = vadd.f32 %v83, 2.550164
    %v86 = vadd.f32 %v84, 2.550164
    %v87 = vmul.f32 %v85, %v77
    %v88 = vmul.f32 %v86, %v78
    %v89 = vadd.f32 %v87, -5.1677127
    %v90 = vadd.f32 %v88, -5.1677127
    %v91 = vmul.f32 %v89, %v77
    %v92 = vmul.f32 %v90, %v78
    %v93 = vadd.f32 %v91, 3.1415927
    %v94 = vadd.f32 %v92, 3.1415927
    %v95 = vmul.f32 %v93, %v75
    %v96 = vmul.f32 %v94, %v76
    %v97 = vadd.f32 %v45, %v73
    %v98 = vadd.f32 %v46, %v74
    %v99 = vmul.f32 %v97, 0.5
    %v100 = vmul.f32 %v98, 0.5
    %v101 = vfloor.f32 %v99
    %v102 = vfloor.f32 %v100
    %v103 = vmul.f32 %v101, 2.0
    %v104 = vmul.f32 %v102, 2.0
    %v105 = vsub.f32 %v97, %v103
    %v106 = vsub.f32 %v98, %v104
    %v107 = vmul.f32 %v105, 2.0
    %v108 = vmul.f32 %v106, 2.0
    %v109 = vsub.f32 1.0, %v107
    %v110 = vsub.f32 1.0, %v108
    %v111 = vmul.f32 %v67, %v41
    %v112 = vmul.f32 %v68, %v42
    %v113 = vmul.f32 %v109, %v111
    %v114 = vmul.f32 %v110, %v112
    %v115 = vmul.f32 %v95, %v41
    %v116 = vmul.f32 %v96, %v42
    %v117 = vmul.f32 %v115, 6.0
    %v118 = vmul.f32 %v116, 6.0
    %v119 = vmul.f32 %v113, %v117
    %v120 = vmul.f32 %v114, %v118
    %v121 = vsel %vm29, 1.0, %v119
    %v122 = vsel %vm30, 1.0, %v120
    %vm123 = vcmp.ge.f32.partialorder %v21, -6.0
    %vm124 = vcmp.ge.f32.partialorder %v22, -6.0
    %vm125 = vcmp.lt.f32.partialorder %v21, 6.0
    %vm126 = vcmp.lt.f32.partialorder %v22, 6.0
    %vm127 = vmand %vm123, %vm125
    %vm128 = vmand %vm124, %vm126
    %v129 = vsel %vm127, %v121, 0.0
    %v130 = vsel %vm128, %v122, 0.0
    %131 = vst [vmem:[#allocation5] sm:$0xff] %v129
    %132 = vst [vmem:[#allocation5 + $0x8] sm:$0xff] %v130
    // Predicated region
    $region10: #{tpu_custom_call.1} parent=1 // pred_check
      _
    $region11: #{tpu_custom_call.1} parent=1 // pred_check_branch
      %134 = sbr.rel (0) target = $region13
    $region12: #{tpu_custom_call.1} parent=1 // pred_region
      %s136 = ssub.s32 256, 256
      %137 = vsyncadd [#allocation4], %s136
      %s139 = sshll.u32 [#allocation5], 4
      %s140 = int_to_ptr.vmem [resolvable:$true] %s139
      %142 = dma.vmem_to_hbm [thread:$0]  %s140, 256, %s1, [#allocation4]
    $region13: #{tpu_custom_call.1} parent=1 // pred_fallthru
      _
    // Predicated region
    $region14: #{tpu_custom_call.1} parent=1 // pred_check
      _
    $region15: #{tpu_custom_call.1} parent=1 // pred_check_branch
      %144 = sbr.rel (0) target = $region17
    $region16: #{tpu_custom_call.1} parent=1 // pred_region
      %145 = dma.done [#allocation4], 256
    $region17: #{tpu_custom_call.1} parent=1 // pred_fallthru
      _
    %146 = vsyncpa [#allocation3], 1
    %147 = vsyncpa [#allocation4], 1

</llo_original>
